<compile_context>
chip_gen: v6e
topology: v6e:2x2x1
jax: 0.10.0
libtpu: 0.0.40
codegen_flags: <defaults>
</compile_context>

<pallas_src>
import jax
import jax.numpy as jnp
from jax.experimental import pallas as pl
from jax.experimental.pallas import tpu as pltpu

LANE = 128     # vreg lane width (last dim)
SUBLANE = 8    # f32 sublane count (second-to-last dim)


def _round_up(n, m):
    return ((n + m - 1) // m) * m


def generator_kernel(x_ref, w1_ref, b1_ref, w2_ref, b2_ref, w3_ref, b3_ref, o_ref):
    # Fused 3-layer MLP on one batch tile: matmuls on the MXU (bf16 operands,
    # f32 accumulate), bias/ReLU on the VPU in f32, tanh on the EUP in f32.
    x = x_ref[...].astype(jnp.bfloat16)

    h1 = jnp.dot(x, w1_ref[...], preferred_element_type=jnp.float32) + b1_ref[...]
    h1 = jnp.maximum(h1, 0.0)                                   # ReLU (f32)

    h2 = jnp.dot(h1.astype(jnp.bfloat16), w2_ref[...],
                 preferred_element_type=jnp.float32) + b2_ref[...]
    h2 = jnp.maximum(h2, 0.0)                                   # ReLU (f32)

    h3 = jnp.dot(h2.astype(jnp.bfloat16), w3_ref[...],
                 preferred_element_type=jnp.float32) + b3_ref[...]
    o_ref[...] = jnp.tanh(h3)                                   # Tanh (f32)


def _pad2(a, rows, cols, dtype):
    a = a.astype(dtype)
    return jnp.pad(a, ((0, rows - a.shape[0]), (0, cols - a.shape[1])))


def generator_forward(x, params, image_size):
    """x: (B, z_dim) float32. Returns (B, 1, image_size, image_size) float32."""
    w1, b1, w2, b2, w3, b3 = params
    B, z_dim = x.shape
    ngf = w1.shape[1]
    out_dim = image_size * image_size

    # Lane-pad feature dims to multiples of 128 (zero padding is exact: padded
    # rows/cols contribute 0 to every dot product and ReLU(0)=0).
    z_p = _round_up(z_dim, LANE)
    ngf_p = _round_up(ngf, LANE)
    out_p = _round_up(out_dim, LANE)

    # Batch tile: >=128 when the batch allows it (fills MXU M rows), otherwise
    # round the batch up to the f32 sublane multiple.
    tile_b = LANE if B >= LANE else _round_up(B, SUBLANE)
    b_p = _round_up(B, tile_b)

    # Wrapper-side one-time padding / casting.
    x_p = _pad2(x, b_p, z_p, jnp.float32)
    w1_p = _pad2(w1, z_p, ngf_p, jnp.bfloat16)
    w2_p = _pad2(w2, ngf_p, ngf_p, jnp.bfloat16)
    w3_p = _pad2(w3, ngf_p, out_p, jnp.bfloat16)
    b1_p = _pad2(b1, 1, ngf_p, jnp.float32)
    b2_p = _pad2(b2, 1, ngf_p, jnp.float32)
    b3_p = _pad2(b3, 1, out_p, jnp.float32)

    # TODO(synk): if ngf / image_size are scaled up, add a second grid axis
    # N-tiling w3/b3/out (and set vmem_limit_bytes) so whole-array w3 residency
    # doesn't blow v7x's 64 MiB VMEM.
    out2d = pl.pallas_call(
        generator_kernel,
        grid_spec=pltpu.PrefetchScalarGridSpec(
            num_scalar_prefetch=0,
            grid=(b_p // tile_b,),
            in_specs=[
                # x streams per batch tile; weights/biases keep a constant block
                # index so they stay VMEM-resident across grid iterations.
                pl.BlockSpec((tile_b, z_p), lambda i: (i, 0)),
                pl.BlockSpec((z_p, ngf_p), lambda i: (0, 0)),
                pl.BlockSpec((1, ngf_p), lambda i: (0, 0)),
                pl.BlockSpec((ngf_p, ngf_p), lambda i: (0, 0)),
                pl.BlockSpec((1, ngf_p), lambda i: (0, 0)),
                pl.BlockSpec((ngf_p, out_p), lambda i: (0, 0)),
                pl.BlockSpec((1, out_p), lambda i: (0, 0)),
            ],
            out_specs=pl.BlockSpec((tile_b, out_p), lambda i: (i, 0)),
        ),
        out_shape=jax.ShapeDtypeStruct((b_p, out_p), jnp.float32),
        compiler_params=pltpu.CompilerParams(
            dimension_semantics=("parallel",)),   # batch tiles are independent
    )(x_p, w1_p, b1_p, w2_p, b2_p, w3_p, b3_p)

    # Drop batch/output padding; final NCHW view same as PyTorch x.view(-1,1,H,W).
    out2d = out2d[:B, :out_dim]
    return out2d.reshape(B, 1, image_size, image_size)


def init_params(key, z_dim, ngf, image_size):
    """Deterministic PyTorch-style uniform(-1/sqrt(fan_in), 1/sqrt(fan_in)) init.

    Weights are stored as (in_features, out_features); biases as (1, out_features)
    so they broadcast cleanly as 2D tiles inside the kernel.
    """
    dims = [(z_dim, ngf), (ngf, ngf), (ngf, image_size * image_size)]
    params = []
    keys = jax.random.split(key, 2 * len(dims))
    for i, (fan_in, fan_out) in enumerate(dims):
        bound = 1.0 / jnp.sqrt(jnp.float32(fan_in))
        w = jax.random.uniform(keys[2 * i], (fan_in, fan_out),
                               minval=-bound, maxval=bound, dtype=jnp.float32)
        b = jax.random.uniform(keys[2 * i + 1], (1, fan_out),
                               minval=-bound, maxval=bound, dtype=jnp.float32)
        params.extend([w, b])
    return tuple(params)


def reference_forward_f32(x, params, image_size):
    """Plain-JAX full-f32 reference (loose check against bf16 kernel)."""
    w1, b1, w2, b2, w3, b3 = params
    h = jnp.maximum(x @ w1 + b1, 0.0)
    h = jnp.maximum(h @ w2 + b2, 0.0)
    h = jnp.tanh(h @ w3 + b3)
    return h.reshape(-1, 1, image_size, image_size)


def reference_forward_bf16(x, params, image_size):
    """Plain-JAX reference with the kernel's exact numerics (bf16 dot operands,
    f32 accumulation and elementwise)."""
    w1, b1, w2, b2, w3, b3 = params
    bf = jnp.bfloat16
    h = jnp.dot(x.astype(bf), w1.astype(bf), preferred_element_type=jnp.float32) + b1
    h = jnp.maximum(h, 0.0)
    h = jnp.dot(h.astype(bf), w2.astype(bf), preferred_element_type=jnp.float32) + b2
    h = jnp.maximum(h, 0.0)
    h = jnp.dot(h.astype(bf), w3.astype(bf), preferred_element_type=jnp.float32) + b3
    h = jnp.tanh(h)
    return h.reshape(-1, 1, image_size, image_size)


if __name__ == "__main__":
    z_dim, ngf, image_size = 32, 64, 16
    batch = 8

    key = jax.random.PRNGKey(0)
    k_x, k_p = jax.random.split(key)
    x = jax.random.normal(k_x, (batch, z_dim), dtype=jnp.float32)
    params = init_params(k_p, z_dim, ngf, image_size)

    out = generator_forward(x, params, image_size)
    out = jax.block_until_ready(out)
    assert out.shape == (batch, 1, image_size, image_size), out.shape

    # Tight check vs. a reference using identical numerics (bf16 matmul operands).
    ref_bf16 = reference_forward_bf16(x, params, image_size)
    assert jnp.allclose(out, ref_bf16, atol=2e-5, rtol=2e-5), "mismatch vs bf16 reference"

    # Sanity check vs. the pure-f32 reference (bf16 rounding tolerance).
    ref_f32 = reference_forward_f32(x, params, image_size)
    assert jnp.allclose(out, ref_f32, atol=5e-2, rtol=5e-2), "mismatch vs f32 reference"

    print("KERNEL_OK")
</pallas_src>

<mosaic_0001>
module attributes {stable_mosaic.version = 11 : i64} {
  func.func @generator_kernel(%arg0: i32, %arg1: memref<8x128xf32, #tpu.memory_space<vmem>>, %arg2: memref<128x128xbf16, #tpu.memory_space<vmem>>, %arg3: memref<1x128xf32, #tpu.memory_space<vmem>>, %arg4: memref<128x128xbf16, #tpu.memory_space<vmem>>, %arg5: memref<1x128xf32, #tpu.memory_space<vmem>>, %arg6: memref<128x256xbf16, #tpu.memory_space<vmem>>, %arg7: memref<1x256xf32, #tpu.memory_space<vmem>>, %arg8: memref<8x256xf32, #tpu.memory_space<vmem>>) attributes {dimension_semantics = [#tpu.dimension_semantics<parallel>], iteration_bounds = array<i64: 1>, scalar_prefetch = 0 : i64, scratch_operands = 0 : i64, tpu.core_type = #tpu.core_type<tc>, window_params = [{transform_indices = @transform_0, window_bounds = array<i64: 8, 128>}, {pipeline_mode = #tpu.pipeline_mode<synchronous>, transform_indices = @transform_1, window_bounds = array<i64: 128, 128>}, {pipeline_mode = #tpu.pipeline_mode<synchronous>, transform_indices = @transform_2, window_bounds = array<i64: 1, 128>}, {pipeline_mode = #tpu.pipeline_mode<synchronous>, transform_indices = @transform_3, window_bounds = array<i64: 128, 128>}, {pipeline_mode = #tpu.pipeline_mode<synchronous>, transform_indices = @transform_4, window_bounds = array<i64: 1, 128>}, {pipeline_mode = #tpu.pipeline_mode<synchronous>, transform_indices = @transform_5, window_bounds = array<i64: 128, 256>}, {pipeline_mode = #tpu.pipeline_mode<synchronous>, transform_indices = @transform_6, window_bounds = array<i64: 1, 256>}, {transform_indices = @transform_7, window_bounds = array<i64: 8, 256>}]} {
    %c0 = arith.constant 0 : index
    %c0_0 = arith.constant 0 : index
    %0 = vector.load %arg1[%c0, %c0_0] : memref<8x128xf32, #tpu.memory_space<vmem>>, vector<8x128xf32>
    %1 = arith.truncf %0 : vector<8x128xf32> to vector<8x128xbf16>
    %c0_1 = arith.constant 0 : index
    %c0_2 = arith.constant 0 : index
    %2 = vector.load %arg2[%c0_1, %c0_2] : memref<128x128xbf16, #tpu.memory_space<vmem>>, vector<128x128xbf16>
    %cst = arith.constant dense<0.000000e+00> : vector<8x128xf32>
    %3 = tpu.matmul %1, %2, %cst {dimension_numbers = #tpu.dot_dimension_numbers<[1], [0], [0], [1], [0, 0, 1, 1], [], []>} : vector<8x128xbf16>, vector<128x128xbf16>, vector<8x128xf32> -> vector<8x128xf32>
    %c0_3 = arith.constant 0 : index
    %c0_4 = arith.constant 0 : index
    %4 = vector.load %arg3[%c0_3, %c0_4] : memref<1x128xf32, #tpu.memory_space<vmem>>, vector<1x128xf32>
    %5 = vector.broadcast %4 : vector<1x128xf32> to vector<8x128xf32>
    %6 = arith.addf %3, %5 : vector<8x128xf32>
    %cst_5 = arith.constant 0.000000e+00 : f32
    %7 = vector.broadcast %cst_5 : f32 to vector<8x128xf32>
    %8 = arith.maximumf %6, %7 : vector<8x128xf32>
    %9 = arith.truncf %8 : vector<8x128xf32> to vector<8x128xbf16>
    %c0_6 = arith.constant 0 : index
    %c0_7 = arith.constant 0 : index
    %10 = vector.load %arg4[%c0_6, %c0_7] : memref<128x128xbf16, #tpu.memory_space<vmem>>, vector<128x128xbf16>
    %cst_8 = arith.constant dense<0.000000e+00> : vector<8x128xf32>
    %11 = tpu.matmul %9, %10, %cst_8 {dimension_numbers = #tpu.dot_dimension_numbers<[1], [0], [0], [1], [0, 0, 1, 1], [], []>} : vector<8x128xbf16>, vector<128x128xbf16>, vector<8x128xf32> -> vector<8x128xf32>
    %c0_9 = arith.constant 0 : index
    %c0_10 = arith.constant 0 : index
    %12 = vector.load %arg5[%c0_9, %c0_10] : memref<1x128xf32, #tpu.memory_space<vmem>>, vector<1x128xf32>
    %13 = vector.broadcast %12 : vector<1x128xf32> to vector<8x128xf32>
    %14 = arith.addf %11, %13 : vector<8x128xf32>
    %cst_11 = arith.constant 0.000000e+00 : f32
    %15 = vector.broadcast %cst_11 : f32 to vector<8x128xf32>
    %16 = arith.maximumf %14, %15 : vector<8x128xf32>
    %17 = arith.truncf %16 : vector<8x128xf32> to vector<8x128xbf16>
    %c0_12 = arith.constant 0 : index
    %c0_13 = arith.constant 0 : index
    %18 = vector.load %arg6[%c0_12, %c0_13] : memref<128x256xbf16, #tpu.memory_space<vmem>>, vector<128x256xbf16>
    %cst_14 = arith.constant dense<0.000000e+00> : vector<8x256xf32>
    %19 = tpu.matmul %17, %18, %cst_14 {dimension_numbers = #tpu.dot_dimension_numbers<[1], [0], [0], [1], [0, 0, 1, 1], [], []>} : vector<8x128xbf16>, vector<128x256xbf16>, vector<8x256xf32> -> vector<8x256xf32>
    %c0_15 = arith.constant 0 : index
    %c0_16 = arith.constant 0 : index
    %20 = vector.load %arg7[%c0_15, %c0_16] : memref<1x256xf32, #tpu.memory_space<vmem>>, vector<1x256xf32>
    %21 = vector.broadcast %20 : vector<1x256xf32> to vector<8x256xf32>
    %22 = arith.addf %19, %21 : vector<8x256xf32>
    %23 = math.tanh %22 : vector<8x256xf32>
    %c0_17 = arith.constant 0 : index
    %c0_18 = arith.constant 0 : index
    %24 = vector.load %arg8[%c0_17, %c0_18] : memref<8x256xf32, #tpu.memory_space<vmem>>, vector<8x256xf32>
    tpu.vector_store %arg8[%c0_17, %c0_18], %23 {strides = array<i32>} : memref<8x256xf32, #tpu.memory_space<vmem>>, vector<8x256xf32>,
    return
  }
  func.func @transform_0(%arg0: i32) -> (i32, i32) {
    %c0_i32 = arith.constant 0 : i32
    %c0_i32_0 = arith.constant 0 : i32
    return %arg0, %c0_i32 : i32, i32
  }
  func.func @transform_1(%arg0: i32) -> (i32, i32) {
    %c0_i32 = arith.constant 0 : i32
    %c0_i32_0 = arith.constant 0 : i32
    %c0_i32_1 = arith.constant 0 : i32
    return %c0_i32, %c0_i32_0 : i32, i32
  }
  func.func @transform_2(%arg0: i32) -> (i32, i32) {
    %c0_i32 = arith.constant 0 : i32
    %c0_i32_0 = arith.constant 0 : i32
    %c0_i32_1 = arith.constant 0 : i32
    return %c0_i32, %c0_i32_0 : i32, i32
  }
  func.func @transform_3(%arg0: i32) -> (i32, i32) {
    %c0_i32 = arith.constant 0 : i32
    %c0_i32_0 = arith.constant 0 : i32
    %c0_i32_1 = arith.constant 0 : i32
    return %c0_i32, %c0_i32_0 : i32, i32
  }
  func.func @transform_4(%arg0: i32) -> (i32, i32) {
    %c0_i32 = arith.constant 0 : i32
    %c0_i32_0 = arith.constant 0 : i32
    %c0_i32_1 = arith.constant 0 : i32
    return %c0_i32, %c0_i32_0 : i32, i32
  }
  func.func @transform_5(%arg0: i32) -> (i32, i32) {
    %c0_i32 = arith.constant 0 : i32
    %c0_i32_0 = arith.constant 0 : i32
    %c0_i32_1 = arith.constant 0 : i32
    return %c0_i32, %c0_i32_0 : i32, i32
  }
  func.func @transform_6(%arg0: i32) -> (i32, i32) {
    %c0_i32 = arith.constant 0 : i32
    %c0_i32_0 = arith.constant 0 : i32
    %c0_i32_1 = arith.constant 0 : i32
    return %c0_i32, %c0_i32_0 : i32, i32
  }
  func.func @transform_7(%arg0: i32) -> (i32, i32) {
    %c0_i32 = arith.constant 0 : i32
    %c0_i32_0 = arith.constant 0 : i32
    return %arg0, %c0_i32 : i32, i32
  }
}

</mosaic_0001>

<llo_original>
// kernel: tpu_custom_call.1
$region0: #{tpu_custom_call.1}
  #allocation0 [shape = 'u32[]', space=smem, size = 0x4, offset = 0x4, fixed_abs, tag = 'smem constant byte address 0x4 - core index']
  #allocation1 [shape = 'u32[144,128]{1,0:T(1,128)}', space=vmem, size = 0x12000, scoped, tag = 'internal scratch']
  %s0 = inlined_call_operand.hbm [shape: f32[8,128], index: 0, kind: input, shape index: {}]
  %s1 = inlined_call_operand.hbm [shape: bf16[128,128], index: 1, kind: input, shape index: {}]
  %s2 = inlined_call_operand.vmem [shape: f32[1,128], index: 2, kind: input, shape index: {}]
  %s3 = inlined_call_operand.hbm [shape: bf16[128,128], index: 3, kind: input, shape index: {}]
  %s4 = inlined_call_operand.vmem [shape: f32[1,128], index: 4, kind: input, shape index: {}]
  %s5 = inlined_call_operand.hbm [shape: bf16[128,256], index: 5, kind: input, shape index: {}]
  %s6 = inlined_call_operand.vmem [shape: f32[1,256], index: 6, kind: input, shape index: {}]
  %s7 = inlined_call_operand.hbm [shape: f32[8,256], index: 7, kind: output, shape index: {}]
  %s8 = sld [smem:[#allocation0]]
  $region54: #{tpu_custom_call.1} parent=0
    _
  %s10 = ssub.s32 1, %s8
  %s11 = scalar_select 0, %s10, %s8
  $region1: #{tpu_custom_call.1} parent=0
    #allocation2 [shape = 'u8[4096]{0}', space=vmem, size = 0x1000, scoped, tag = 'input window, operand 0, single buffered']
    #allocation3 [shape = 's32[1]{0}', space=sflag, size = 0x4, scoped, tag = 'scoped memory for tpu_custom_call.1']
    #allocation4 [shape = 's32[1]{0}', space=sflag, size = 0x4, scoped, tag = 'scoped memory for tpu_custom_call.1']
    #allocation5 [shape = 'u8[32768]{0}', space=vmem, size = 0x8000, scoped, tag = 'input window, operand 1, single buffered']
    #allocation6 [shape = 's32[1]{0}', space=sflag, size = 0x4, scoped, tag = 'scoped memory for tpu_custom_call.1']
    #allocation7 [shape = 'u8[32768]{0}', space=vmem, size = 0x8000, scoped, tag = 'input window, operand 3, single buffered']
    #allocation8 [shape = 'u8[65536]{0}', space=vmem, size = 0x10000, scoped, tag = 'input window, operand 5, single buffered']
    #allocation9 [shape = 's32[1]{0}', space=sflag, size = 0x4, scoped, tag = 'scoped memory for tpu_custom_call.1']
    #allocation10 [shape = 'u8[8192]{0}', space=vmem, size = 0x2000, scoped, tag = 'output window, operand 0, single buffered']
    %12 = vsyncpa [#allocation3], 0
    %13 = vsyncpa [#allocation6], 0
    %14 = vsyncpa [#allocation9], 0
    %15 = vsyncpa [#allocation4], 0
    // Predicated region
    $region2: #{tpu_custom_call.1} parent=1 // pred_check
      _
    $region3: #{tpu_custom_call.1} parent=1 // pred_check_branch
      %17 = sbr.rel (0) target = $region5
    $region4: #{tpu_custom_call.1} parent=1 // pred_region
      %s19 = ssub.s32 128, 128
      %20 = vsyncadd [#allocation3], %s19
      %s22 = sshll.u32 [#allocation2], 4
      %s23 = int_to_ptr.vmem [resolvable:$true] %s22
      %25 = dma.hbm_to_vmem [thread:$0]  %s0, 128, %s23, [#allocation3]
    $region5: #{tpu_custom_call.1} parent=1 // pred_fallthru
      _
    // Predicated region
    $region6: #{tpu_custom_call.1} parent=1 // pred_check
      _
    $region7: #{tpu_custom_call.1} parent=1 // pred_check_branch
      %27 = sbr.rel (0) target = $region9
    $region8: #{tpu_custom_call.1} parent=1 // pred_region
      %s29 = ssub.s32 1024, 1024
      %30 = vsyncadd [#allocation6], %s29
      %s31 = sshll.u32 [#allocation5], 4
      %s32 = int_to_ptr.vmem [resolvable:$true] %s31
      %37 = dma.hbm_to_vmem [thread:$0]  %s1, 1024, %s32, [#allocation6], 64, 64, 4
    $region9: #{tpu_custom_call.1} parent=1 // pred_fallthru
      _
    // Predicated region
    $region10: #{tpu_custom_call.1} parent=1 // pred_check
      _
    $region11: #{tpu_custom_call.1} parent=1 // pred_check_branch
      %39 = sbr.rel (0) target = $region13
    $region12: #{tpu_custom_call.1} parent=1 // pred_region
      _
    $region13: #{tpu_custom_call.1} parent=1 // pred_fallthru
      _
    // Predicated region
    $region14: #{tpu_custom_call.1} parent=1 // pred_check
      _
    $region15: #{tpu_custom_call.1} parent=1 // pred_check_branch
      %41 = sbr.rel (0) target = $region17
    $region16: #{tpu_custom_call.1} parent=1 // pred_region
      %s43 = ssub.s32 1024, 1024
      %44 = vsyncadd [#allocation6], %s43
      %s45 = sshll.u32 [#allocation7], 4
      %s46 = int_to_ptr.vmem [resolvable:$true] %s45
      %51 = dma.hbm_to_vmem [thread:$0]  %s3, 1024, %s46, [#allocation6], 64, 64, 4
    $region17: #{tpu_custom_call.1} parent=1 // pred_fallthru
      _
    // Predicated region
    $region18: #{tpu_custom_call.1} parent=1 // pred_check
      _
    $region19: #{tpu_custom_call.1} parent=1 // pred_check_branch
      %53 = sbr.rel (0) target = $region21
    $region20: #{tpu_custom_call.1} parent=1 // pred_region
      _
    $region21: #{tpu_custom_call.1} parent=1 // pred_fallthru
      _
    // Predicated region
    $region22: #{tpu_custom_call.1} parent=1 // pred_check
      _
    $region23: #{tpu_custom_call.1} parent=1 // pred_check_branch
      %55 = sbr.rel (0) target = $region25
    $region24: #{tpu_custom_call.1} parent=1 // pred_region
      %s57 = ssub.s32 2048, 2048
      %58 = vsyncadd [#allocation9], %s57
      %s59 = sshll.u32 [#allocation8], 4
      %s60 = int_to_ptr.vmem [resolvable:$true] %s59
      %65 = dma.hbm_to_vmem [thread:$0]  %s5, 2048, %s60, [#allocation9], 128, 128, 8
    $region25: #{tpu_custom_call.1} parent=1 // pred_fallthru
      _
    // Predicated region
    $region26: #{tpu_custom_call.1} parent=1 // pred_check
      _
    $region27: #{tpu_custom_call.1} parent=1 // pred_check_branch
      %67 = sbr.rel (0) target = $region29
    $region28: #{tpu_custom_call.1} parent=1 // pred_region
      _
    $region29: #{tpu_custom_call.1} parent=1 // pred_fallthru
      _
    // Predicated region
    $region30: #{tpu_custom_call.1} parent=1 // pred_check
      _
    $region31: #{tpu_custom_call.1} parent=1 // pred_check_branch
      %69 = sbr.rel (0) target = $region33
    $region32: #{tpu_custom_call.1} parent=1 // pred_region
      %70 = dma.done [#allocation3], 128
    $region33: #{tpu_custom_call.1} parent=1 // pred_fallthru
      _
    // Predicated region
    $region34: #{tpu_custom_call.1} parent=1 // pred_check
      _
    $region35: #{tpu_custom_call.1} parent=1 // pred_check_branch
      %72 = sbr.rel (0) target = $region37
    $region36: #{tpu_custom_call.1} parent=1 // pred_region
      %73 = dma.done [#allocation6], 1024
    $region37: #{tpu_custom_call.1} parent=1 // pred_fallthru
      _
    // Predicated region
    $region38: #{tpu_custom_call.1} parent=1 // pred_check
      _
    $region39: #{tpu_custom_call.1} parent=1 // pred_check_branch
      %75 = sbr.rel (0) target = $region41
    $region40: #{tpu_custom_call.1} parent=1 // pred_region
      %76 = dma.done [#allocation6], 1024
    $region41: #{tpu_custom_call.1} parent=1 // pred_fallthru
      _
    // Predicated region
    $region42: #{tpu_custom_call.1} parent=1 // pred_check
      _
    $region43: #{tpu_custom_call.1} parent=1 // pred_check_branch
      %78 = sbr.rel (0) target = $region45
    $region44: #{tpu_custom_call.1} parent=1 // pred_region
      %79 = dma.done [#allocation9], 2048
    $region45: #{tpu_custom_call.1} parent=1 // pred_fallthru
      _
    %v81 = vld [vmem:[#allocation2] sm:$0xff]
    %v82 = vpack.c.bf16 %v81, %v81
    %v83 = vld [vmem:[#allocation5] sm:$0xf]
    %v84 = vld [vmem:[#allocation5 + $0x4] sm:$0xf]
    %v85 = vld [vmem:[#allocation5 + $0x8] sm:$0xf]
    %v86 = vld [vmem:[#allocation5 + $0xc] sm:$0xf]
    %v87 = vld [vmem:[#allocation5 + $0x10] sm:$0xf]
    %v88 = vld [vmem:[#allocation5 + $0x14] sm:$0xf]
    %v89 = vld [vmem:[#allocation5 + $0x18] sm:$0xf]
    %v90 = vld [vmem:[#allocation5 + $0x1c] sm:$0xf]
    %v91 = vld [vmem:[#allocation5 + $0x20] sm:$0xf]
    %v92 = vld [vmem:[#allocation5 + $0x24] sm:$0xf]
    %v93 = vld [vmem:[#allocation5 + $0x28] sm:$0xf]
    %v94 = vld [vmem:[#allocation5 + $0x2c] sm:$0xf]
    %v95 = vld [vmem:[#allocation5 + $0x30] sm:$0xf]
    %v96 = vld [vmem:[#allocation5 + $0x34] sm:$0xf]
    %v97 = vld [vmem:[#allocation5 + $0x38] sm:$0xf]
    %v98 = vld [vmem:[#allocation5 + $0x3c] sm:$0xf]
    %v99 = vld [vmem:[%s2] sm:$0x1]
    %v101 = vlaneseq
    %v102 = vshrl.u32 %v101, 7
    %v103 = vsub.s32 0, %v102
    %v104 = vrot.slane %v99, %v103
    %v122 = vunpack.c.l.b16 %v83
    %v123 = vunpack.c.l.b16 %v84
    %v124 = vunpack.c.l.b16 %v85
    %v125 = vunpack.c.l.b16 %v86
    %v126 = vunpack.c.l.b16 %v87
    %v127 = vunpack.c.l.b16 %v88
    %v128 = vunpack.c.l.b16 %v89
    %v129 = vunpack.c.l.b16 %v90
    %v130 = vunpack.c.l.b16 %v91
    %v131 = vunpack.c.l.b16 %v92
    %v132 = vunpack.c.l.b16 %v93
    %v133 = vunpack.c.l.b16 %v94
    %v134 = vunpack.c.l.b16 %v95
    %v135 = vunpack.c.l.b16 %v96
    %v136 = vunpack.c.l.b16 %v97
    %v137 = vunpack.c.l.b16 %v98
    %v138 = vpack.c.b16 %v123, %v122
    %v139 = vpack.c.b16 %v125, %v124
    %v140 = vpack.c.b16 %v127, %v126
    %v141 = vpack.c.b16 %v129, %v128
    %v142 = vpack.c.b16 %v131, %v130
    %v143 = vpack.c.b16 %v133, %v132
    %v144 = vpack.c.b16 %v135, %v134
    %v145 = vpack.c.b16 %v137, %v136
    %154 = vmatprep.subr.bf16.mxu0 0
    %155 = vmatpush1.bf16.msra.mxu0 %v145
    %156 = vmatprep.subr.bf16.mxu0 0
    %157 = vmatpush1.bf16.msra.mxu0 %v144
    %158 = vmatprep.subr.bf16.mxu0 0
    %159 = vmatpush1.bf16.msra.mxu0 %v143
    %160 = vmatprep.subr.bf16.mxu0 0
    %161 = vmatpush1.bf16.msra.mxu0 %v142
    %162 = vmatprep.subr.bf16.mxu0 0
    %163 = vmatpush1.bf16.msra.mxu0 %v141
    %164 = vmatprep.subr.bf16.mxu0 0
    %165 = vmatpush1.bf16.msra.mxu0 %v140
    %166 = vmatprep.subr.bf16.mxu0 0
    %167 = vmatpush1.bf16.msra.mxu0 %v139
    %168 = vmatprep.subr.bf16.mxu0 0
    %169 = vmatpush1.bf16.msra.mxu0 %v138
    %170 = vmatprep.subr.bf16.mxu0 0
    %171 = vmatpush2.bf16.msra.mxu0 0
    %172 = vmatprep.subr.bf16.mxu0 0
    %173 = vmatpush2.bf16.msra.mxu0 0
    %174 = vmatprep.subr.bf16.mxu0 0
    %175 = vmatpush2.bf16.msra.mxu0 0
    %176 = vmatprep.subr.bf16.mxu0 0
    %177 = vmatpush2.bf16.msra.mxu0 0
    %178 = vmatprep.subr.bf16.mxu0 0
    %179 = vmatpush2.bf16.msra.mxu0 0
    %180 = vmatprep.subr.bf16.mxu0 0
    %181 = vmatpush2.bf16.msra.mxu0 0
    %182 = vmatprep.subr.bf16.mxu0 0
    %183 = vmatpush2.bf16.msra.mxu0 0
    %184 = vmatprep.subr.bf16.mxu0 0
    %185 = vmatpush2.bf16.msra.mxu0 0
    %186 = vmatprep.mubr.bf16.mxu0 0
    %187 = vmatmul.mubr.bf16.gmra.mxu0 %v82
    %v188 = vpop.f32.mrf.mxu0
    %v189 = vadd.f32 %v104, %v188
    %v190 = vpop.f32.mrf.mxu0
    %v191 = vpop.f32.mrf.mxu0
    %v192 = vpop.f32.mrf.mxu0
    %193 = vdwg.mxu0
    %v194 = vmax.f32 %v189, 0.0
    %v195 = vpack.c.bf16 %v194, %v194
    %v196 = vld [vmem:[#allocation7] sm:$0xf]
    %v197 = vld [vmem:[#allocation7 + $0x4] sm:$0xf]
    %v198 = vld [vmem:[#allocation7 + $0x8] sm:$0xf]
    %v199 = vld [vmem:[#allocation7 + $0xc] sm:$0xf]
    %v200 = vld [vmem:[#allocation7 + $0x10] sm:$0xf]
    %v201 = vld [vmem:[#allocation7 + $0x14] sm:$0xf]
    %v202 = vld [vmem:[#allocation7 + $0x18] sm:$0xf]
    %v203 = vld [vmem:[#allocation7 + $0x1c] sm:$0xf]
    %v204 = vld [vmem:[#allocation7 + $0x20] sm:$0xf]
    %v205 = vld [vmem:[#allocation7 + $0x24] sm:$0xf]
    %v206 = vld [vmem:[#allocation7 + $0x28] sm:$0xf]
    %v207 = vld [vmem:[#allocation7 + $0x2c] sm:$0xf]
    %v208 = vld [vmem:[#allocation7 + $0x30] sm:$0xf]
    %v209 = vld [vmem:[#allocation7 + $0x34] sm:$0xf]
    %v210 = vld [vmem:[#allocation7 + $0x38] sm:$0xf]
    %v211 = vld [vmem:[#allocation7 + $0x3c] sm:$0xf]
    %v212 = vld [vmem:[%s4] sm:$0x1]
    %v214 = vlaneseq
    %v215 = vshrl.u32 %v214, 7
    %v216 = vsub.s32 0, %v215
    %v217 = vrot.slane %v212, %v216
    %v235 = vunpack.c.l.b16 %v196
    %v236 = vunpack.c.l.b16 %v197
    %v237 = vunpack.c.l.b16 %v198
    %v238 = vunpack.c.l.b16 %v199
    %v239 = vunpack.c.l.b16 %v200
    %v240 = vunpack.c.l.b16 %v201
    %v241 = vunpack.c.l.b16 %v202
    %v242 = vunpack.c.l.b16 %v203
    %v243 = vunpack.c.l.b16 %v204
    %v244 = vunpack.c.l.b16 %v205
    %v245 = vunpack.c.l.b16 %v206
    %v246 = vunpack.c.l.b16 %v207
    %v247 = vunpack.c.l.b16 %v208
    %v248 = vunpack.c.l.b16 %v209
    %v249 = vunpack.c.l.b16 %v210
    %v250 = vunpack.c.l.b16 %v211
    %v251 = vpack.c.b16 %v236, %v235
    %v252 = vpack.c.b16 %v238, %v237
    %v253 = vpack.c.b16 %v240, %v239
    %v254 = vpack.c.b16 %v242, %v241
    %v255 = vpack.c.b16 %v244, %v243
    %v256 = vpack.c.b16 %v246, %v245
    %v257 = vpack.c.b16 %v248, %v247
    %v258 = vpack.c.b16 %v250, %v249
    %267 = vmatprep.subr.bf16.mxu0 0
    %268 = vmatpush1.bf16.msra.mxu0 %v258
    %269 = vmatprep.subr.bf16.mxu0 0
    %270 = vmatpush1.bf16.msra.mxu0 %v257
    %271 = vmatprep.subr.bf16.mxu0 0
    %272 = vmatpush1.bf16.msra.mxu0 %v256
    %273 = vmatprep.subr.bf16.mxu0 0
    %274 = vmatpush1.bf16.msra.mxu0 %v255
    %275 = vmatprep.subr.bf16.mxu0 0
    %276 = vmatpush1.bf16.msra.mxu0 %v254
    %277 = vmatprep.subr.bf16.mxu0 0
    %278 = vmatpush1.bf16.msra.mxu0 %v253
    %279 = vmatprep.subr.bf16.mxu0 0
    %280 = vmatpush1.bf16.msra.mxu0 %v252
    %281 = vmatprep.subr.bf16.mxu0 0
    %282 = vmatpush1.bf16.msra.mxu0 %v251
    %283 = vmatprep.subr.bf16.mxu0 0
    %284 = vmatpush2.bf16.msra.mxu0 0
    %285 = vmatprep.subr.bf16.mxu0 0
    %286 = vmatpush2.bf16.msra.mxu0 0
    %287 = vmatprep.subr.bf16.mxu0 0
    %288 = vmatpush2.bf16.msra.mxu0 0
    %289 = vmatprep.subr.bf16.mxu0 0
    %290 = vmatpush2.bf16.msra.mxu0 0
    %291 = vmatprep.subr.bf16.mxu0 0
    %292 = vmatpush2.bf16.msra.mxu0 0
    %293 = vmatprep.subr.bf16.mxu0 0
    %294 = vmatpush2.bf16.msra.mxu0 0
    %295 = vmatprep.subr.bf16.mxu0 0
    %296 = vmatpush2.bf16.msra.mxu0 0
    %297 = vmatprep.subr.bf16.mxu0 0
    %298 = vmatpush2.bf16.msra.mxu0 0
    %299 = vmatprep.mubr.bf16.mxu0 0
    %300 = vmatmul.mubr.bf16.gmra.mxu0 %v195
    %v301 = vpop.f32.mrf.mxu0
    %v302 = vadd.f32 %v217, %v301
    %v303 = vpop.f32.mrf.mxu0
    %v304 = vpop.f32.mrf.mxu0
    %v305 = vpop.f32.mrf.mxu0
    %306 = vdwg.mxu0
    %v307 = vmax.f32 %v302, 0.0
    %v308 = vpack.c.bf16 %v307, %v307
    %v309 = vld [vmem:[#allocation8] sm:$0xff]
    %v310 = vld [vmem:[#allocation8 + $0x8] sm:$0xff]
    %v311 = vld [vmem:[#allocation8 + $0x10] sm:$0xff]
    %v312 = vld [vmem:[#allocation8 + $0x18] sm:$0xff]
    %v313 = vld [vmem:[#allocation8 + $0x20] sm:$0xff]
    %v314 = vld [vmem:[#allocation8 + $0x28] sm:$0xff]
    %v315 = vld [vmem:[#allocation8 + $0x30] sm:$0xff]
    %v316 = vld [vmem:[#allocation8 + $0x38] sm:$0xff]
    %v317 = vld [vmem:[#allocation8 + $0x40] sm:$0xff]
    %v318 = vld [vmem:[#allocation8 + $0x48] sm:$0xff]
    %v319 = vld [vmem:[#allocation8 + $0x50] sm:$0xff]
    %v320 = vld [vmem:[#allocation8 + $0x58] sm:$0xff]
    %v321 = vld [vmem:[#allocation8 + $0x60] sm:$0xff]
    %v322 = vld [vmem:[#allocation8 + $0x68] sm:$0xff]
    %v323 = vld [vmem:[#allocation8 + $0x70] sm:$0xff]
    %v324 = vld [vmem:[#allocation8 + $0x78] sm:$0xff]
    %v325 = vld [vmem:[%s6] sm:$0x3]
    %v327 = vlaneseq
    %v328 = vshrl.u32 %v327, 7
    %v329 = vsub.s32 0, %v328
    %v330 = vrot.slane %v325, %v329
    %v331 = vlaneseq
    %v332 = vshrl.u32 %v331, 7
    %v333 = vsub.s32 1, %v332
    %v334 = vrot.slane %v325, %v333
    %v353 = vunpack.c.l.b16 %v309
    %v354 = vunpack.c.h.b16 %v309
    %v355 = vunpack.c.l.b16 %v310
    %v356 = vunpack.c.h.b16 %v310
    %v357 = vunpack.c.l.b16 %v311
    %v358 = vunpack.c.h.b16 %v311
    %v359 = vunpack.c.l.b16 %v312
    %v360 = vunpack.c.h.b16 %v312
    %v361 = vunpack.c.l.b16 %v313
    %v362 = vunpack.c.h.b16 %v313
    %v363 = vunpack.c.l.b16 %v314
    %v364 = vunpack.c.h.b16 %v314
    %v365 = vunpack.c.l.b16 %v315
    %v366 = vunpack.c.h.b16 %v315
    %v367 = vunpack.c.l.b16 %v316
    %v368 = vunpack.c.h.b16 %v316
    %v369 = vunpack.c.l.b16 %v317
    %v370 = vunpack.c.h.b16 %v317
    %v371 = vunpack.c.l.b16 %v318
    %v372 = vunpack.c.h.b16 %v318
    %v373 = vunpack.c.l.b16 %v319
    %v374 = vunpack.c.h.b16 %v319
    %v375 = vunpack.c.l.b16 %v320
    %v376 = vunpack.c.h.b16 %v320
    %v377 = vunpack.c.l.b16 %v321
    %v378 = vunpack.c.h.b16 %v321
    %v379 = vunpack.c.l.b16 %v322
    %v380 = vunpack.c.h.b16 %v322
    %v381 = vunpack.c.l.b16 %v323
    %v382 = vunpack.c.h.b16 %v323
    %v383 = vunpack.c.l.b16 %v324
    %v384 = vunpack.c.h.b16 %v324
    %v385 = vpack.c.b16 %v355, %v353
    %v386 = vpack.c.b16 %v356, %v354
    %v387 = vpack.c.b16 %v359, %v357
    %v388 = vpack.c.b16 %v360, %v358
    %v389 = vpack.c.b16 %v363, %v361
    %v390 = vpack.c.b16 %v364, %v362
    %v391 = vpack.c.b16 %v367, %v365
    %v392 = vpack.c.b16 %v368, %v366
    %v393 = vpack.c.b16 %v371, %v369
    %v394 = vpack.c.b16 %v372, %v370
    %v395 = vpack.c.b16 %v375, %v373
    %v396 = vpack.c.b16 %v376, %v374
    %v397 = vpack.c.b16 %v379, %v377
    %v398 = vpack.c.b16 %v380, %v378
    %v399 = vpack.c.b16 %v383, %v381
    %v400 = vpack.c.b16 %v384, %v382
    %417 = vmatprep.subr.bf16.mxu0 %v400
    %418 = vmatpush1.bf16.msra.mxu0 %v399
    %419 = vmatprep.subr.bf16.mxu0 %v398
    %420 = vmatpush1.bf16.msra.mxu0 %v397
    %421 = vmatprep.subr.bf16.mxu0 %v396
    %422 = vmatpush1.bf16.msra.mxu0 %v395
    %423 = vmatprep.subr.bf16.mxu0 %v394
    %424 = vmatpush1.bf16.msra.mxu0 %v393
    %425 = vmatprep.subr.bf16.mxu0 %v392
    %426 = vmatpush1.bf16.msra.mxu0 %v391
    %427 = vmatprep.subr.bf16.mxu0 %v390
    %428 = vmatpush1.bf16.msra.mxu0 %v389
    %429 = vmatprep.subr.bf16.mxu0 %v388
    %430 = vmatpush1.bf16.msra.mxu0 %v387
    %431 = vmatprep.subr.bf16.mxu0 %v386
    %432 = vmatpush1.bf16.msra.mxu0 %v385
    %433 = vmatprep.subr.bf16.mxu0 0
    %434 = vmatpush2.bf16.msra.mxu0 0
    %435 = vmatprep.subr.bf16.mxu0 0
    %436 = vmatpush2.bf16.msra.mxu0 0
    %437 = vmatprep.subr.bf16.mxu0 0
    %438 = vmatpush2.bf16.msra.mxu0 0
    %439 = vmatprep.subr.bf16.mxu0 0
    %440 = vmatpush2.bf16.msra.mxu0 0
    %441 = vmatprep.subr.bf16.mxu0 0
    %442 = vmatpush2.bf16.msra.mxu0 0
    %443 = vmatprep.subr.bf16.mxu0 0
    %444 = vmatpush2.bf16.msra.mxu0 0
    %445 = vmatprep.subr.bf16.mxu0 0
    %446 = vmatpush2.bf16.msra.mxu0 0
    %447 = vmatprep.subr.bf16.mxu0 0
    %448 = vmatpush2.bf16.msra.mxu0 0
    %449 = vmatprep.mubr.bf16.mxu0 0
    %450 = vmatmul.mubr.bf16.gmra.mxu0 %v308
    %v451 = vpop.f32.mrf.mxu0
    %v452 = vadd.f32 %v330, %v451
    %v453 = vpop.f32.mrf.mxu0
    %v454 = vadd.f32 %v334, %v453
    %v455 = vpop.f32.mrf.mxu0
    %v456 = vpop.f32.mrf.mxu0
    %457 = vdwg.mxu0
    %v458 = vtanh.pop %v452
    %v459 = vtanh.pop %v454
    %460 = vst [vmem:[#allocation10] sm:$0xff] %v458
    %461 = vst [vmem:[#allocation10 + $0x8] sm:$0xff] %v459
    // Predicated region
    $region46: #{tpu_custom_call.1} parent=1 // pred_check
      _
    $region47: #{tpu_custom_call.1} parent=1 // pred_check_branch
      %463 = sbr.rel (0) target = $region49
    $region48: #{tpu_custom_call.1} parent=1 // pred_region
      %s465 = ssub.s32 256, 256
      %466 = vsyncadd [#allocation4], %s465
      %s468 = sshll.u32 [#allocation10], 4
      %s469 = int_to_ptr.vmem [resolvable:$true] %s468
      %471 = dma.vmem_to_hbm [thread:$0]  %s469, 256, %s7, [#allocation4]
    $region49: #{tpu_custom_call.1} parent=1 // pred_fallthru
      _
    // Predicated region
    $region50: #{tpu_custom_call.1} parent=1 // pred_check
      _
    $region51: #{tpu_custom_call.1} parent=1 // pred_check_branch
      %473 = sbr.rel (0) target = $region53
    $region52: #{tpu_custom_call.1} parent=1 // pred_region
      %474 = dma.done [#allocation4], 256
    $region53: #{tpu_custom_call.1} parent=1 // pred_fallthru
      _
    %475 = vsyncpa [#allocation3], 1
    %476 = vsyncpa [#allocation6], 1
    %477 = vsyncpa [#allocation9], 1
    %478 = vsyncpa [#allocation4], 1

</llo_original>
